<compile_context>
chip_gen: v7x
topology: tpu7x:2x2x1
jax: 0.10.0
libtpu: 0.0.40
codegen_flags: <defaults>
</compile_context>

<pallas_src>
import functools

import jax
import jax.numpy as jnp
from jax import lax
from jax.experimental import pallas as pl
from jax.experimental.pallas import tpu as pltpu


def _round_up(x, m):
    return ((x + m - 1) // m) * m


def _cdiv(a, b):
    return (a + b - 1) // b


def _vmem_capacity_bytes():
    """Generation-aware VMEM capacity; conservative 64 MiB (v7x) fallback."""
    try:
        info = pltpu.get_tpu_info()
        cap = int(getattr(info, "vmem_capacity_bytes", 0) or 0)
        if cap > 0:
            return cap
    except Exception:
        pass
    return 64 * 1024 * 1024


def lora_kernel(x_ref, a_ref, b_ref, o_ref, acc_ref, *,
                alpha, tk_eff, num_k, k_rem, out_chunk):
    """One (tm, out_pad) output tile; grid axis 1 reduces over in_dim."""
    k = pl.program_id(1)

    @pl.when(k == 0)
    def _():
        acc_ref[...] = jnp.zeros_like(acc_ref)

    x = x_ref[...]
    if k_rem:
        # Last K block extends past in_dim: the OOB columns of the x tile may
        # contain stale VMEM garbage, so zero them (A's padded rows are zero,
        # but garbage could be NaN/Inf). Only emitted for ragged in_dim.
        col = lax.broadcasted_iota(jnp.int32, x.shape, 1)
        valid = jnp.where(k == num_k - 1, k_rem, tk_eff)
        x = jnp.where(col < valid, x, jnp.zeros_like(x))

    # A is fully resident in VMEM; take the K-slice for this step.
    if num_k == 1:
        a = a_ref[...]
    else:
        a = a_ref[pl.ds(pl.multiple_of(k * tk_eff, 128), tk_eff), :]

    # First matmul: accumulate (tm, rank) in f32.
    acc_ref[...] += jnp.dot(x, a, preferred_element_type=jnp.float32)

    @pl.when(k == num_k - 1)
    def _():
        # Scale the small rank-sized intermediate, cast back to the weight
        # dtype (keeps the fast bf16 MXU path for bf16 weights), then do the
        # second matmul chunked over out_pad so the f32 result stays bounded.
        xa = (alpha * acc_ref[...]).astype(b_ref.dtype)
        out_pad = o_ref.shape[-1]
        for c0 in range(0, out_pad, out_chunk):
            sl = pl.ds(c0, out_chunk)
            y = jnp.dot(xa, b_ref[:, sl], preferred_element_type=jnp.float32)
            o_ref[:, sl] = y.astype(o_ref.dtype)


def lora_forward(x, A, B, alpha, *, tile_m=None, tile_k=None):
    """y = alpha * (x @ A @ B). tile_m / tile_k override the auto tile search
    (testing / tuning only)."""
    M, in_dim = x.shape
    rank, out_dim = B.shape
    assert A.shape == (in_dim, rank)

    dtype = x.dtype
    itemsize = jnp.dtype(dtype).itemsize
    sub = {4: 8, 2: 16, 1: 32}.get(itemsize, 8)   # sublane packing granularity

    cap = _vmem_capacity_bytes()
    budget = int(0.60 * cap)
    vmem_limit = int(0.80 * cap)

    # Lane-dense output: pad out_dim (B columns only — B is tiny) to 128.
    out_pad = _round_up(out_dim, 128)
    out_chunk = out_pad if out_pad <= 512 else next(
        c for c in (512, 256, 128) if out_pad % c == 0)

    r_lane = _round_up(rank, 128)          # VMEM lane padding of rank-dim arrays
    m_full = _round_up(M, sub)             # no benefit in tm beyond this

    def vmem_need(tm, tk_eff, in_pad_a):
        return (2 * tm * tk_eff * itemsize              # x (double-buffered)
                + 2 * tm * out_pad * itemsize           # out (double-buffered)
                + 2 * in_pad_a * r_lane * itemsize      # resident A (lane-padded)
                + 2 * _round_up(rank, sub) * out_pad * itemsize  # B
                + tm * r_lane * 4                       # f32 accumulator
                + tm * (out_chunk + r_lane) * 4)        # epilogue intermediates

    if tile_m is not None or tile_k is not None:
        # Manual override (testing / tuning).
        if tile_k is None or tile_k >= in_dim:
            tk_eff = in_dim
        else:
            tk_eff = max(128, (int(tile_k) // 128) * 128)
        tm = _round_up(min(int(tile_m) if tile_m is not None else m_full,
                           m_full), sub)
    else:
        # Joint (tm, tk) search: maximize per-step x DMA bytes under budget.
        tk_cands = sorted({c for c in (4096, 2048, 1024, 512, 256, 128)
                           if c < in_dim} | {in_dim}, reverse=True)
        tm_cands = (2048, 1024, 512, 256, 128, 64, 32, 16, 8)
        best = None
        for tk_c in tk_cands:
            k_steps = _cdiv(in_dim, tk_c)
            in_pad_a = k_steps * tk_c
            for tm_c in tm_cands:
                tm_try = min(tm_c, m_full)
                if vmem_need(tm_try, tk_c, in_pad_a) > budget:
                    continue
                x_step = tm_try * tk_c * itemsize
                score = (min(x_step, 8 * 1024 * 1024), tm_try, tk_c)
                if best is None or score > best[0]:
                    best = (score, tm_try, tk_c)
        if best is None:
            # Degenerate fallback: smallest legal tiles.
            tk_eff = in_dim if in_dim <= 128 else 128
            tm = min(8, m_full)
        else:
            _, tm, tk_eff = best

    # Give the parallel (batch) axis >= 2 programs when M allows, so both
    # v7x TensorCores get work (harmless single extra step on v5e/v6e).
    if _cdiv(M, tm) < 2 and M > sub:
        tm_half = _round_up(_cdiv(M, 2), sub)
        if sub <= tm_half < tm:
            tm = tm_half

    num_k = _cdiv(in_dim, tk_eff)
    in_pad_a = num_k * tk_eff
    k_rem = in_dim % tk_eff if num_k > 1 else 0

    # Only the tiny weight tensors are padded; x is never copied.
    Ap = A if in_pad_a == in_dim else jnp.pad(A, ((0, in_pad_a - in_dim), (0, 0)))
    Bp = B if out_pad == out_dim else jnp.pad(B, ((0, 0), (0, out_pad - out_dim)))

    grid = (_cdiv(M, tm), num_k)

    cost = pl.CostEstimate(
        flops=2 * M * rank * (in_dim + out_dim),
        transcendentals=0,
        bytes_accessed=int(x.size * itemsize + Ap.size * itemsize
                           + Bp.size * itemsize + M * out_pad * itemsize),
    )

    out = pl.pallas_call(
        functools.partial(lora_kernel, alpha=float(alpha), tk_eff=tk_eff,
                          num_k=num_k, k_rem=int(k_rem), out_chunk=out_chunk),
        out_shape=jax.ShapeDtypeStruct((M, out_pad), dtype),
        grid_spec=pltpu.PrefetchScalarGridSpec(
            num_scalar_prefetch=0,
            grid=grid,
            in_specs=[
                pl.BlockSpec((tm, tk_eff), lambda i, k: (i, k)),       # x tiles
                pl.BlockSpec((in_pad_a, rank), lambda i, k: (0, 0)),   # A resident
                pl.BlockSpec((rank, out_pad), lambda i, k: (0, 0)),    # B resident
            ],
            out_specs=pl.BlockSpec((tm, out_pad), lambda i, k: (i, 0)),
            scratch_shapes=[pltpu.VMEM((tm, rank), jnp.float32)],
        ),
        compiler_params=pltpu.CompilerParams(
            dimension_semantics=("parallel", "arbitrary"),
            vmem_limit_bytes=vmem_limit,
        ),
        cost_estimate=cost,
    )(x, Ap, Bp)

    return out if out_pad == out_dim else out[:, :out_dim]


def init_lora_params(key, in_dim, rank, out_dim, dtype=jnp.float32):
    """Matches LoRALayer.__init__: A ~ kaiming_uniform_ (default a=0), B = 0.

    For a (in_dim, rank) tensor PyTorch uses fan_in = rank, gain = sqrt(2),
    so bound = sqrt(6 / rank).
    """
    bound = float(jnp.sqrt(6.0 / rank))
    A = jax.random.uniform(key, (in_dim, rank), dtype, minval=-bound, maxval=bound)
    B = jnp.zeros((rank, out_dim), dtype)
    return A, B


if __name__ == "__main__":
    key = jax.random.PRNGKey(0)
    k_x, k_a, k_b, k_x2, k_a2, k_b2, k_x3, k_a3, k_b3 = jax.random.split(key, 9)

    hp = jax.lax.Precision.HIGHEST

    # --- 1) Module-spec shapes, zero-init B (matches LoRALayer.__init__) ---
    batch, in_dim, rank, out_dim = 8, 32, 4, 32
    alpha = 2.0

    x = jax.random.normal(k_x, (batch, in_dim), jnp.float32)
    A, B = init_lora_params(k_a, in_dim, rank, out_dim)

    y = lora_forward(x, A, B, alpha)
    jax.block_until_ready(y)
    y_ref = alpha * (x @ A @ B)
    assert y.shape == (batch, out_dim)
    assert jnp.allclose(y, y_ref, atol=1e-5), "mismatch with zero-init B"

    # --- 2) Same shapes with a non-zero B so the math is actually exercised ---
    B_nz = jax.random.normal(k_b, (rank, out_dim), jnp.float32)
    y2 = lora_forward(x, A, B_nz, alpha)
    jax.block_until_ready(y2)
    y2_ref = alpha * jnp.dot(jnp.dot(x, A, precision=hp), B_nz, precision=hp)
    assert jnp.allclose(y2, y2_ref, atol=1e-4, rtol=1e-4), "mismatch with random B"

    # --- 3) Ragged batch (no x padding) + out_dim lane-padding ---
    M2, D2, R2, O2 = 100, 640, 8, 96
    x3 = jax.random.normal(k_x2, (M2, D2), jnp.float32)
    bound3 = float(jnp.sqrt(6.0 / R2))
    A3 = jax.random.uniform(k_a2, (D2, R2), jnp.float32, minval=-bound3, maxval=bound3)
    B3 = jax.random.normal(k_b2, (R2, O2), jnp.float32)
    y3 = lora_forward(x3, A3, B3, alpha)
    jax.block_until_ready(y3)
    y3_ref = alpha * jnp.dot(jnp.dot(x3, A3, precision=hp), B3, precision=hp)
    assert y3.shape == (M2, O2)
    assert jnp.allclose(y3, y3_ref, atol=1e-2, rtol=1e-3), "mismatch (ragged batch)"

    # --- 4) Forced K-tiling with a ragged in_dim tail (in-kernel K mask) ---
    M4, D4, R4, O4 = 24, 200, 4, 48
    x4 = jax.random.normal(k_x3, (M4, D4), jnp.float32)
    bound4 = float(jnp.sqrt(6.0 / R4))
    A4 = jax.random.uniform(k_a3, (D4, R4), jnp.float32, minval=-bound4, maxval=bound4)
    B4 = jax.random.normal(k_b3, (R4, O4), jnp.float32)
    y4 = lora_forward(x4, A4, B4, alpha, tile_m=8, tile_k=128)
    jax.block_until_ready(y4)
    y4_ref = alpha * jnp.dot(jnp.dot(x4, A4, precision=hp), B4, precision=hp)
    assert y4.shape == (M4, O4)
    assert jnp.allclose(y4, y4_ref, atol=1e-2, rtol=1e-3), "mismatch (K-tiled path)"

    # --- 5) bf16 inputs keep the bf16 MXU path (intermediate cast in-kernel) ---
    xb, Ab, Bb = (t.astype(jnp.bfloat16) for t in (x, A, B_nz))
    y5 = lora_forward(xb, Ab, Bb, alpha)
    jax.block_until_ready(y5)
    y5_ref = alpha * (xb.astype(jnp.float32) @ Ab.astype(jnp.float32)
                      @ Bb.astype(jnp.float32))
    assert jnp.allclose(y5.astype(jnp.float32), y5_ref, atol=0.5, rtol=5e-2), \
        "mismatch (bf16 path)"

    print("KERNEL_OK")
</pallas_src>

<mosaic_0001>
module attributes {stable_mosaic.version = 11 : i64} {
  func.func @lora_kernel(%arg0: i32, %arg1: i32, %arg2: memref<8x32xf32, #tpu.memory_space<vmem>>, %arg3: memref<32x4xf32, #tpu.memory_space<vmem>>, %arg4: memref<4x128xf32, #tpu.memory_space<vmem>>, %arg5: memref<8x128xf32, #tpu.memory_space<vmem>>, %arg6: memref<8x4xf32, #tpu.memory_space<vmem>>) attributes {dimension_semantics = [#tpu.dimension_semantics<parallel>, #tpu.dimension_semantics<arbitrary>], iteration_bounds = array<i64: 1, 1>, scalar_prefetch = 0 : i64, scratch_operands = 1 : i64, tpu.core_type = #tpu.core_type<tc>, window_params = [{transform_indices = @transform_0, window_bounds = array<i64: 8, 32>}, {pipeline_mode = #tpu.pipeline_mode<synchronous>, transform_indices = @transform_1, window_bounds = array<i64: 32, 4>}, {pipeline_mode = #tpu.pipeline_mode<synchronous>, transform_indices = @transform_2, window_bounds = array<i64: 4, 128>}, {transform_indices = @transform_3, window_bounds = array<i64: 8, 128>}]} {
    %c0_i32 = arith.constant 0 : i32
    %0 = arith.cmpi eq, %arg1, %c0_i32 : i32
    %1 = arith.extui %0 : i1 to i32
    %c0_i32_0 = arith.constant 0 : i32
    %2 = arith.cmpi ne, %1, %c0_i32_0 : i32
    scf.if %2 {
      %cst_10 = arith.constant 0.000000e+00 : f32
      %12 = vector.broadcast %cst_10 : f32 to vector<8x4xf32>
      %c0_11 = arith.constant 0 : index
      %c0_12 = arith.constant 0 : index
      %13 = vector.load %arg6[%c0_11, %c0_12] : memref<8x4xf32, #tpu.memory_space<vmem>>, vector<8x4xf32>
      tpu.vector_store %arg6[%c0_11, %c0_12], %12 {strides = array<i32>} : memref<8x4xf32, #tpu.memory_space<vmem>>, vector<8x4xf32>,
    } else {
    }
    %c0 = arith.constant 0 : index
    %c0_1 = arith.constant 0 : index
    %3 = vector.load %arg2[%c0, %c0_1] : memref<8x32xf32, #tpu.memory_space<vmem>>, vector<8x32xf32>
    %c0_2 = arith.constant 0 : index
    %c0_3 = arith.constant 0 : index
    %4 = vector.load %arg3[%c0_2, %c0_3] : memref<32x4xf32, #tpu.memory_space<vmem>>, vector<32x4xf32>
    %c0_4 = arith.constant 0 : index
    %c0_5 = arith.constant 0 : index
    %5 = vector.load %arg6[%c0_4, %c0_5] : memref<8x4xf32, #tpu.memory_space<vmem>>, vector<8x4xf32>
    %cst = arith.constant dense<0.000000e+00> : vector<8x4xf32>
    %6 = tpu.matmul %3, %4, %cst {dimension_numbers = #tpu.dot_dimension_numbers<[1], [0], [0], [1], [0, 0, 1, 1], [], []>} : vector<8x32xf32>, vector<32x4xf32>, vector<8x4xf32> -> vector<8x4xf32>
    %7 = arith.addf %5, %6 : vector<8x4xf32>
    %c0_6 = arith.constant 0 : index
    %c0_7 = arith.constant 0 : index
    %8 = vector.load %arg6[%c0_6, %c0_7] : memref<8x4xf32, #tpu.memory_space<vmem>>, vector<8x4xf32>
    tpu.vector_store %arg6[%c0_6, %c0_7], %7 {strides = array<i32>} : memref<8x4xf32, #tpu.memory_space<vmem>>, vector<8x4xf32>,
    %c0_i32_8 = arith.constant 0 : i32
    %9 = arith.cmpi eq, %arg1, %c0_i32_8 : i32
    %10 = arith.extui %9 : i1 to i32
    %c0_i32_9 = arith.constant 0 : i32
    %11 = arith.cmpi ne, %10, %c0_i32_9 : i32
    scf.if %11 {
      %c0_10 = arith.constant 0 : index
      %c0_11 = arith.constant 0 : index
      %12 = vector.load %arg6[%c0_10, %c0_11] : memref<8x4xf32, #tpu.memory_space<vmem>>, vector<8x4xf32>
      %cst_12 = arith.constant 2.000000e+00 : f32
      %13 = vector.broadcast %cst_12 : f32 to vector<8x4xf32>
      %14 = arith.mulf %13, %12 : vector<8x4xf32>
      %c0_13 = arith.constant 0 : index
      %c0_14 = arith.constant 0 : index
      %15 = vector.load %arg4[%c0_13, %c0_14] : memref<4x128xf32, #tpu.memory_space<vmem>>, vector<4x128xf32>
      %cst_15 = arith.constant dense<0.000000e+00> : vector<8x128xf32>
      %16 = tpu.matmul %14, %15, %cst_15 {dimension_numbers = #tpu.dot_dimension_numbers<[1], [0], [0], [1], [0, 0, 1, 1], [], []>} : vector<8x4xf32>, vector<4x128xf32>, vector<8x128xf32> -> vector<8x128xf32>
      %c0_16 = arith.constant 0 : index
      %c0_17 = arith.constant 0 : index
      %17 = vector.load %arg5[%c0_16, %c0_17] : memref<8x128xf32, #tpu.memory_space<vmem>>, vector<8x128xf32>
      tpu.vector_store %arg5[%c0_16, %c0_17], %16 {strides = array<i32>} : memref<8x128xf32, #tpu.memory_space<vmem>>, vector<8x128xf32>,
    } else {
    }
    return
  }
  func.func @transform_0(%arg0: i32, %arg1: i32) -> (i32, i32) {
    %c0_i32 = arith.constant 0 : i32
    return %arg0, %arg1 : i32, i32
  }
  func.func @transform_1(%arg0: i32, %arg1: i32) -> (i32, i32) {
    %c0_i32 = arith.constant 0 : i32
    %c0_i32_0 = arith.constant 0 : i32
    %c0_i32_1 = arith.constant 0 : i32
    return %c0_i32, %c0_i32_0 : i32, i32
  }
  func.func @transform_2(%arg0: i32, %arg1: i32) -> (i32, i32) {
    %c0_i32 = arith.constant 0 : i32
    %c0_i32_0 = arith.constant 0 : i32
    %c0_i32_1 = arith.constant 0 : i32
    return %c0_i32, %c0_i32_0 : i32, i32
  }
  func.func @transform_3(%arg0: i32, %arg1: i32) -> (i32, i32) {
    %c0_i32 = arith.constant 0 : i32
    %c0_i32_0 = arith.constant 0 : i32
    return %arg0, %c0_i32 : i32, i32
  }
}

</mosaic_0001>

<llo_original>
// kernel: tpu_custom_call.1
$region0: #{tpu_custom_call.1}
  #allocation0 [shape = 'u32[]', space=smem, size = 0x4, offset = 0x4, fixed_abs, tag = 'smem constant byte address 0x4 - core index']
  #allocation1 [shape = 'u32[144,128]{1,0:T(1,128)}', space=vmem, size = 0x12000, scoped, tag = 'internal scratch']
  #allocation2 [shape = 'f32[8,4]{1,0:T(8,128)}', space=vmem, size = 0x1000, scoped, tag = 'scratch operand']
  %s0 = inlined_call_operand.vmem [shape: f32[8,32], index: 0, kind: input, shape index: {}]
  %s1 = inlined_call_operand.vmem [shape: f32[32,4], index: 1, kind: input, shape index: {}]
  %s2 = inlined_call_operand.vmem [shape: f32[4,128], index: 2, kind: input, shape index: {}]
  %s3 = inlined_call_operand.hbm [shape: f32[8,128], index: 3, kind: output, shape index: {}]
  %s4 = sld [smem:[#allocation0]]
  $region30: #{tpu_custom_call.1} parent=0
    _
  %s6 = ssub.s32 1, %s4
  %s7 = scalar_select 0, %s6, %s4
  $region1: #{tpu_custom_call.1} parent=0
    #allocation3 [shape = 'u8[4096]{0}', space=vmem, size = 0x1000, scoped, tag = 'output window, operand 0, single buffered']
    #allocation4 [shape = 's32[1]{0}', space=sflag, size = 0x4, scoped, tag = 'scoped memory for tpu_custom_call.1']
    %8 = vsyncpa [#allocation4], 0
    // Predicated region
    $region2: #{tpu_custom_call.1} parent=1 // pred_check
      _
    $region3: #{tpu_custom_call.1} parent=1 // pred_check_branch
      %10 = sbr.rel (0) target = $region5
    $region4: #{tpu_custom_call.1} parent=1 // pred_region
      _
    $region5: #{tpu_custom_call.1} parent=1 // pred_fallthru
      _
    // Predicated region
    $region6: #{tpu_custom_call.1} parent=1 // pred_check
      _
    $region7: #{tpu_custom_call.1} parent=1 // pred_check_branch
      %12 = sbr.rel (0) target = $region9
    $region8: #{tpu_custom_call.1} parent=1 // pred_region
      _
    $region9: #{tpu_custom_call.1} parent=1 // pred_fallthru
      _
    // Predicated region
    $region10: #{tpu_custom_call.1} parent=1 // pred_check
      _
    $region11: #{tpu_custom_call.1} parent=1 // pred_check_branch
      %14 = sbr.rel (0) target = $region13
    $region12: #{tpu_custom_call.1} parent=1 // pred_region
      _
    $region13: #{tpu_custom_call.1} parent=1 // pred_fallthru
      _
    %p15 = scmp.eq.s32.totalorder 0, 0
    // Predicated region
    $region14: #{tpu_custom_call.1} parent=1 // pred_check
      %p16 = pneg %p15
    $region15: #{tpu_custom_call.1} parent=1 // pred_check_branch
      %18 = sbr.rel (%p16) target = $region17
    $region16: #{tpu_custom_call.1} parent=1 // pred_region
      %vm19 = vcmask 31744
      %20 = vst.msk [vmem:[#allocation2] sm:$0xff] %vm19, 0.0
    $region17: #{tpu_custom_call.1} parent=1 // pred_fallthru
      _
    %v21 = vld [vmem:[%s0] sm:$0xff]
    %v22 = vld [vmem:[%s1] sm:$0xff]
    %v23 = vld [vmem:[%s1 + $0x8] sm:$0xff]
    %v24 = vld [vmem:[%s1 + $0x10] sm:$0xff]
    %v25 = vld [vmem:[%s1 + $0x18] sm:$0xff]
    %v26 = vld [vmem:[#allocation2] sm:$0xff]
    %vm27 = vcmask 261120
    %v29 = vsel %vm27, %v21, 0
    %31 = vmatprep.subr.mxu0 0.0
    %32 = vmatpush1.msra.mxu0 %v22
    %33 = vmatprep.subr.mxu0 0.0
    %34 = vmatpush1.msra.mxu0 %v23
    %35 = vmatprep.subr.mxu0 0.0
    %36 = vmatpush1.msra.mxu0 %v24
    %37 = vmatprep.subr.mxu0 0.0
    %38 = vmatpush1.msra.mxu0 %v25
    %39 = vmatprep.subr.mxu0 0.0
    %40 = vmatpush1.msra.mxu0 0.0
    %41 = vmatprep.subr.mxu0 0.0
    %42 = vmatpush1.msra.mxu0 0.0
    %43 = vmatprep.subr.mxu0 0.0
    %44 = vmatpush1.msra.mxu0 0.0
    %45 = vmatprep.subr.mxu0 0.0
    %46 = vmatpush1.msra.mxu0 0.0
    %47 = vmatprep.subr.mxu0 0.0
    %48 = vmatpush1.msra.mxu0 0.0
    %49 = vmatprep.subr.mxu0 0.0
    %50 = vmatpush1.msra.mxu0 0.0
    %51 = vmatprep.subr.mxu0 0.0
    %52 = vmatpush1.msra.mxu0 0.0
    %53 = vmatprep.subr.mxu0 0.0
    %54 = vmatpush1.msra.mxu0 0.0
    %55 = vmatprep.subr.mxu0 0.0
    %56 = vmatpush1.msra.mxu0 0.0
    %57 = vmatprep.subr.mxu0 0.0
    %58 = vmatpush1.msra.mxu0 0.0
    %59 = vmatprep.subr.mxu0 0.0
    %60 = vmatpush1.msra.mxu0 0.0
    %61 = vmatprep.subr.mxu0 0.0
    %62 = vmatpush1.msra.mxu0 0.0
    %63 = vmatprep.subr.mxu0 0.0
    %64 = vmatpush1.msra.mxu0 0.0
    %65 = vmatprep.subr.mxu0 0.0
    %66 = vmatpush1.msra.mxu0 0.0
    %67 = vmatprep.subr.mxu0 0.0
    %68 = vmatpush1.msra.mxu0 0.0
    %69 = vmatprep.subr.mxu0 0.0
    %70 = vmatpush1.msra.mxu0 0.0
    %71 = vmatprep.subr.mxu0 0.0
    %72 = vmatpush1.msra.mxu0 0.0
    %73 = vmatprep.subr.mxu0 0.0
    %74 = vmatpush1.msra.mxu0 0.0
    %75 = vmatprep.subr.mxu0 0.0
    %76 = vmatpush1.msra.mxu0 0.0
    %77 = vmatprep.subr.mxu0 0.0
    %78 = vmatpush1.msra.mxu0 0.0
    %79 = vmatprep.subr.mxu0 0.0
    %80 = vmatpush1.msra.mxu0 0.0
    %81 = vmatprep.subr.mxu0 0.0
    %82 = vmatpush1.msra.mxu0 0.0
    %83 = vmatprep.subr.mxu0 0.0
    %84 = vmatpush1.msra.mxu0 0.0
    %85 = vmatprep.subr.mxu0 0.0
    %86 = vmatpush1.msra.mxu0 0.0
    %87 = vmatprep.subr.mxu0 0.0
    %88 = vmatpush1.msra.mxu0 0.0
    %89 = vmatprep.subr.mxu0 0.0
    %90 = vmatpush1.msra.mxu0 0.0
    %91 = vmatprep.subr.mxu0 0.0
    %92 = vmatpush1.msra.mxu0 0.0
    %93 = vmatprep.subr.mxu0 0.0
    %94 = vmatpush1.msra.mxu0 0.0
    %95 = vmatprep.mubr.f32.mxu0 0.0
    %96 = vmatmul.mubr.f32.gmra.mrb[0].mxu0 %v29
    %v97 = vpop.f32.mrb[0].mxu0
    %v98 = vadd.f32 0.0, %v97
    %v99 = vpop.f32.mrb[0].mxu0
    %100 = vdwg.mxu0
    %v101 = vadd.f32 %v26, %v98
    %vm102 = vcmask 31744
    %103 = vst.msk [vmem:[#allocation2] sm:$0xff] %vm102, %v101
    // Predicated region
    $region18: #{tpu_custom_call.1} parent=1 // pred_check
      %p104 = pneg %p15
    $region19: #{tpu_custom_call.1} parent=1 // pred_check_branch
      %106 = sbr.rel (%p104) target = $region21
    $region20: #{tpu_custom_call.1} parent=1 // pred_region
      %v107 = vld [vmem:[#allocation2] sm:$0xff]
      %v108 = vmul.f32 %v107, 2.0
      %v109 = vld [vmem:[%s2] sm:$0xf]
      %v111 = vsel %vm102, %v108, 0
      %vm113 = vcmask 1043456
      %v115 = vsel %vm113, %v109, 0
      %117 = vmatprep.subr.mxu0 0.0
      %118 = vmatpush1.msra.mxu0 %v115
      %119 = vmatprep.subr.mxu0 0.0
      %120 = vmatpush1.msra.mxu0 0.0
      %121 = vmatprep.subr.mxu0 0.0
      %122 = vmatpush1.msra.mxu0 0.0
      %123 = vmatprep.subr.mxu0 0.0
      %124 = vmatpush1.msra.mxu0 0.0
      %125 = vmatprep.subr.mxu0 0.0
      %126 = vmatpush1.msra.mxu0 0.0
      %127 = vmatprep.subr.mxu0 0.0
      %128 = vmatpush1.msra.mxu0 0.0
      %129 = vmatprep.subr.mxu0 0.0
      %130 = vmatpush1.msra.mxu0 0.0
      %131 = vmatprep.subr.mxu0 0.0
      %132 = vmatpush1.msra.mxu0 0.0
      %133 = vmatprep.subr.mxu0 0.0
      %134 = vmatpush1.msra.mxu0 0.0
      %135 = vmatprep.subr.mxu0 0.0
      %136 = vmatpush1.msra.mxu0 0.0
      %137 = vmatprep.subr.mxu0 0.0
      %138 = vmatpush1.msra.mxu0 0.0
      %139 = vmatprep.subr.mxu0 0.0
      %140 = vmatpush1.msra.mxu0 0.0
      %141 = vmatprep.subr.mxu0 0.0
      %142 = vmatpush1.msra.mxu0 0.0
      %143 = vmatprep.subr.mxu0 0.0
      %144 = vmatpush1.msra.mxu0 0.0
      %145 = vmatprep.subr.mxu0 0.0
      %146 = vmatpush1.msra.mxu0 0.0
      %147 = vmatprep.subr.mxu0 0.0
      %148 = vmatpush1.msra.mxu0 0.0
      %149 = vmatprep.subr.mxu0 0.0
      %150 = vmatpush1.msra.mxu0 0.0
      %151 = vmatprep.subr.mxu0 0.0
      %152 = vmatpush1.msra.mxu0 0.0
      %153 = vmatprep.subr.mxu0 0.0
      %154 = vmatpush1.msra.mxu0 0.0
      %155 = vmatprep.subr.mxu0 0.0
      %156 = vmatpush1.msra.mxu0 0.0
      %157 = vmatprep.subr.mxu0 0.0
      %158 = vmatpush1.msra.mxu0 0.0
      %159 = vmatprep.subr.mxu0 0.0
      %160 = vmatpush1.msra.mxu0 0.0
      %161 = vmatprep.subr.mxu0 0.0
      %162 = vmatpush1.msra.mxu0 0.0
      %163 = vmatprep.subr.mxu0 0.0
      %164 = vmatpush1.msra.mxu0 0.0
      %165 = vmatprep.subr.mxu0 0.0
      %166 = vmatpush1.msra.mxu0 0.0
      %167 = vmatprep.subr.mxu0 0.0
      %168 = vmatpush1.msra.mxu0 0.0
      %169 = vmatprep.subr.mxu0 0.0
      %170 = vmatpush1.msra.mxu0 0.0
      %171 = vmatprep.subr.mxu0 0.0
      %172 = vmatpush1.msra.mxu0 0.0
      %173 = vmatprep.subr.mxu0 0.0
      %174 = vmatpush1.msra.mxu0 0.0
      %175 = vmatprep.subr.mxu0 0.0
      %176 = vmatpush1.msra.mxu0 0.0
      %177 = vmatprep.subr.mxu0 0.0
      %178 = vmatpush1.msra.mxu0 0.0
      %179 = vmatprep.subr.mxu0 0.0
      %180 = vmatpush1.msra.mxu0 0.0
      %181 = vmatprep.mubr.f32.mxu0 0.0
      %182 = vmatmul.mubr.f32.gmra.mrb[0].mxu0 %v111
      %v183 = vpop.f32.mrb[0].mxu0
      %v184 = vadd.f32 0.0, %v183
      %v185 = vpop.f32.mrb[0].mxu0
      %186 = vdwg.mxu0
      %187 = vst [vmem:[#allocation3] sm:$0xff] %v184
    $region21: #{tpu_custom_call.1} parent=1 // pred_fallthru
      _
    // Predicated region
    $region22: #{tpu_custom_call.1} parent=1 // pred_check
      _
    $region23: #{tpu_custom_call.1} parent=1 // pred_check_branch
      %189 = sbr.rel (0) target = $region25
    $region24: #{tpu_custom_call.1} parent=1 // pred_region
      %s191 = ssub.s32 128, 128
      %192 = vsyncadd [#allocation4], %s191
      %s194 = sshll.u32 [#allocation3], 4
      %s195 = int_to_ptr.vmem [resolvable:$true] %s194
      %197 = dma.vmem_to_hbm [thread:$0]  %s195, 128, %s3, [#allocation4]
    $region25: #{tpu_custom_call.1} parent=1 // pred_fallthru
      _
    // Predicated region
    $region26: #{tpu_custom_call.1} parent=1 // pred_check
      _
    $region27: #{tpu_custom_call.1} parent=1 // pred_check_branch
      %199 = sbr.rel (0) target = $region29
    $region28: #{tpu_custom_call.1} parent=1 // pred_region
      %200 = dma.done [#allocation4], 128
    $region29: #{tpu_custom_call.1} parent=1 // pred_fallthru
      _
    %201 = vsyncpa [#allocation4], 1

</llo_original>
